<compile_context>
chip_gen: v7x
topology: tpu7x:2x2x1
jax: 0.10.0
libtpu: 0.0.40
codegen_flags: <defaults>
</compile_context>

<pallas_src>
import jax
import jax.numpy as jnp
from jax import lax
from jax.experimental import pallas as pl
from jax.experimental.pallas import tpu as pltpu


def critic_kernel(x_ref, w1_ref, b1_ref, w2_ref, b2_ref, wq_ref, bq_ref, q_ref):
    # ---- layer 1: fused concat-linear, computed on the VPU as per-column FMAs ----
    # K = input_dims + n_actions is tiny (3); an MXU matmul here would be pure padding.
    h1 = b1_ref[...]                                     # [1, fc1] broadcasts on first add
    for j in range(x_ref.shape[1]):                      # unrolled at trace time (K = 3)
        h1 = h1 + x_ref[:, j:j + 1] * w1_ref[j:j + 1, :]
    h1 = jnp.maximum(h1, 0.0)                            # [TB, fc1], f32

    # ---- layer 2: the real matmul, bf16 on the MXU with f32 accumulation ----
    h2 = jnp.dot(h1.astype(jnp.bfloat16), w2_ref[...],
                 preferred_element_type=jnp.float32) + b2_ref[...]
    h2 = jnp.maximum(h2, 0.0)                            # [TB, fc2], f32

    # ---- output layer (N=1): lane-dense [1, TB] row ----
    # Contract fc2 of wq [1, fc2] with fc2 of h2 [TB, fc2] (standard "NT" dot
    # pattern) so the batch index lands in lanes; no minor-dim transpose needed.
    q_row = lax.dot_general(
        wq_ref[...], h2,
        dimension_numbers=(((1,), (1,)), ((), ())),
        preferred_element_type=jnp.float32) + bq_ref[0, 0]
    q_ref[...] = q_row.astype(q_ref.dtype)               # [1, TB]


def critic_forward(state, action, params):
    """state: [B, input_dims], action: [B, n_actions] -> q: [B, 1]."""
    w1, b1, w2_bf16, b2, wq, bq = params
    B = state.shape[0]
    K, fc1 = w1.shape
    fc2 = w2_bf16.shape[1]

    # Fuse the concat once in the wrapper: one lane-sparse activation DMA per grid
    # step inside the kernel instead of two. The [B, 3] concat itself is ~3 KB.
    x = jnp.concatenate([state, action], axis=1)
    assert x.shape[1] == K

    # Batch tiling: cap the tile so huge batches never materialize B x 256 f32
    # intermediates in one block (v7x VMEM = 64 MiB).  512 is a multiple of both
    # 8 (sublanes) and 128 (lanes), so ragged last blocks satisfy the tiling rules
    # for the input (TB, K) block and the lane-dense (1, TB) output block.
    TB_CAP = 512
    TB = B if B <= TB_CAP else TB_CAP
    nb = pl.cdiv(B, TB)

    cost = pl.CostEstimate(
        flops=2 * B * (K * fc1 + fc1 * fc2 + fc2),
        transcendentals=0,
        bytes_accessed=int(x.size) * 4 + B * 4            # activations in/out
        + int(w1.size) * 4 + int(b1.size) * 4              # layer-1 weights
        + int(w2_bf16.size) * 2 + int(b2.size) * 4         # bf16 matmul weights
        + int(wq.size) * 4 + 4,                            # output layer
    )

    grid_spec = pltpu.PrefetchScalarGridSpec(
        num_scalar_prefetch=0,
        grid=(nb,),
        in_specs=[
            pl.BlockSpec((TB, K), lambda i: (i, 0)),        # fused [state|action] tile
            pl.BlockSpec((K, fc1), lambda i: (0, 0)),       # w1 (resident)
            pl.BlockSpec((1, fc1), lambda i: (0, 0)),       # b1 (resident)
            pl.BlockSpec((fc1, fc2), lambda i: (0, 0)),     # w2 bf16 (resident)
            pl.BlockSpec((1, fc2), lambda i: (0, 0)),       # b2 (resident)
            pl.BlockSpec((1, fc2), lambda i: (0, 0)),       # wq row vector (resident)
            pl.BlockSpec(memory_space=pltpu.MemorySpace.SMEM),  # bq scalar in SMEM
        ],
        # Lane-dense output: one [1, TB] row per batch block.
        out_specs=pl.BlockSpec((1, TB), lambda i: (0, i)),
    )

    q_row = pl.pallas_call(
        critic_kernel,
        out_shape=jax.ShapeDtypeStruct((1, B), jnp.float32),
        grid_spec=grid_spec,
        compiler_params=pltpu.CompilerParams(
            # On v7x with nb >= 2, pltpu.CORE_PARALLEL here shards blocks across
            # both TensorCores; plain "parallel" is kept for portability.
            dimension_semantics=("parallel",)),
        cost_estimate=cost,
    )(x, w1, b1, w2_bf16, b2, wq, bq)

    return q_row.reshape(B, 1)


def init_params(key, input_dims=1, n_actions=2, fc1_dims=256, fc2_dims=256):
    """Deterministic init mimicking nn.Linear's U(-1/sqrt(fan_in), 1/sqrt(fan_in)).

    Weights are stored pre-transposed as [in_features, out_features].  w2 is stored
    as bf16 (the cast is hoisted out of the per-call path), and wq is stored as a
    [1, fc2] row vector so the kernel's final dot emits a lane-dense row.
    """
    def linear(key, fan_in, fan_out):
        kw, kb = jax.random.split(key)
        bound = 1.0 / jnp.sqrt(jnp.float32(fan_in))
        w = jax.random.uniform(kw, (fan_in, fan_out), jnp.float32, -bound, bound)
        b = jax.random.uniform(kb, (1, fan_out), jnp.float32, -bound, bound)
        return w, b

    k1, k2, k3 = jax.random.split(key, 3)
    w1, b1 = linear(k1, input_dims + n_actions, fc1_dims)
    w2, b2 = linear(k2, fc1_dims, fc2_dims)
    wq_col, bq = linear(k3, fc2_dims, 1)                  # [fc2, 1]
    return (w1, b1, w2.astype(jnp.bfloat16), b2, wq_col.T, bq)


def critic_reference(state, action, params):
    """Pure-JAX f32 reference matching the PyTorch module's forward."""
    w1, b1, w2_bf16, b2, wq, bq = params
    x = jnp.concatenate([state, action], axis=1)
    h1 = jnp.maximum(x @ w1 + b1, 0.0)
    h2 = jnp.maximum(h1 @ w2_bf16.astype(jnp.float32) + b2, 0.0)
    return h2 @ wq.T + bq


if __name__ == "__main__":
    B, input_dims, n_actions = 8, 1, 2
    fc1_dims = fc2_dims = 256

    key = jax.random.PRNGKey(0)
    kp, ks, ka = jax.random.split(key, 3)

    params = init_params(kp, input_dims, n_actions, fc1_dims, fc2_dims)
    state = jax.random.normal(ks, (B, input_dims), jnp.float32)
    action = jax.random.normal(ka, (B, n_actions), jnp.float32)

    q = critic_forward(state, action, params)
    q = jax.block_until_ready(q)

    q_ref = critic_reference(state, action, params)
    assert q.shape == (B, 1), q.shape
    # Tolerance loosened because the fc1->fc2 matmul runs in bf16 (f32 accumulate).
    assert jnp.allclose(q, q_ref, atol=2e-2, rtol=2e-2), "mismatch vs JAX reference"

    print("KERNEL_OK")
</pallas_src>

<mosaic_0001>
module attributes {stable_mosaic.version = 11 : i64} {
  func.func @critic_kernel(%arg0: i32, %arg1: memref<8x3xf32, #tpu.memory_space<vmem>>, %arg2: memref<3x256xf32, #tpu.memory_space<vmem>>, %arg3: memref<1x256xf32, #tpu.memory_space<vmem>>, %arg4: memref<256x256xbf16, #tpu.memory_space<vmem>>, %arg5: memref<1x256xf32, #tpu.memory_space<vmem>>, %arg6: memref<1x256xf32, #tpu.memory_space<vmem>>, %arg7: memref<1x1xf32, #tpu.memory_space<smem>>, %arg8: memref<1x8xf32, #tpu.memory_space<vmem>>) attributes {dimension_semantics = [#tpu.dimension_semantics<parallel>], iteration_bounds = array<i64: 1>, scalar_prefetch = 0 : i64, scratch_operands = 0 : i64, tpu.core_type = #tpu.core_type<tc>, window_params = [{transform_indices = @transform_0, window_bounds = array<i64: 8, 3>}, {pipeline_mode = #tpu.pipeline_mode<synchronous>, transform_indices = @transform_1, window_bounds = array<i64: 3, 256>}, {pipeline_mode = #tpu.pipeline_mode<synchronous>, transform_indices = @transform_2, window_bounds = array<i64: 1, 256>}, {pipeline_mode = #tpu.pipeline_mode<synchronous>, transform_indices = @transform_3, window_bounds = array<i64: 256, 256>}, {pipeline_mode = #tpu.pipeline_mode<synchronous>, transform_indices = @transform_4, window_bounds = array<i64: 1, 256>}, {pipeline_mode = #tpu.pipeline_mode<synchronous>, transform_indices = @transform_5, window_bounds = array<i64: 1, 256>}, {transform_indices = @transform_6, window_bounds = array<i64: 1, 1>}, {transform_indices = @transform_7, window_bounds = array<i64: 1, 8>}]} {
    %c0 = arith.constant 0 : index
    %c0_0 = arith.constant 0 : index
    %0 = vector.load %arg3[%c0, %c0_0] : memref<1x256xf32, #tpu.memory_space<vmem>>, vector<1x256xf32>
    %c0_1 = arith.constant 0 : index
    %c0_2 = arith.constant 0 : index
    %1 = vector.load %arg1[%c0_1, %c0_2] : memref<8x3xf32, #tpu.memory_space<vmem>>, vector<8x1xf32>
    %c0_3 = arith.constant 0 : index
    %c0_4 = arith.constant 0 : index
    %2 = vector.load %arg2[%c0_3, %c0_4] : memref<3x256xf32, #tpu.memory_space<vmem>>, vector<1x256xf32>
    %3 = vector.broadcast %1 : vector<8x1xf32> to vector<8x256xf32>
    %4 = vector.broadcast %2 : vector<1x256xf32> to vector<8x256xf32>
    %5 = arith.mulf %3, %4 : vector<8x256xf32>
    %6 = vector.broadcast %0 : vector<1x256xf32> to vector<8x256xf32>
    %7 = arith.addf %6, %5 : vector<8x256xf32>
    %c0_5 = arith.constant 0 : index
    %c1 = arith.constant 1 : index
    %8 = vector.load %arg1[%c0_5, %c1] : memref<8x3xf32, #tpu.memory_space<vmem>>, vector<8x1xf32>
    %c1_6 = arith.constant 1 : index
    %c0_7 = arith.constant 0 : index
    %9 = vector.load %arg2[%c1_6, %c0_7] : memref<3x256xf32, #tpu.memory_space<vmem>>, vector<1x256xf32>
    %10 = vector.broadcast %8 : vector<8x1xf32> to vector<8x256xf32>
    %11 = vector.broadcast %9 : vector<1x256xf32> to vector<8x256xf32>
    %12 = arith.mulf %10, %11 : vector<8x256xf32>
    %13 = arith.addf %7, %12 : vector<8x256xf32>
    %c0_8 = arith.constant 0 : index
    %c2 = arith.constant 2 : index
    %14 = vector.load %arg1[%c0_8, %c2] : memref<8x3xf32, #tpu.memory_space<vmem>>, vector<8x1xf32>
    %c2_9 = arith.constant 2 : index
    %c0_10 = arith.constant 0 : index
    %15 = vector.load %arg2[%c2_9, %c0_10] : memref<3x256xf32, #tpu.memory_space<vmem>>, vector<1x256xf32>
    %16 = vector.broadcast %14 : vector<8x1xf32> to vector<8x256xf32>
    %17 = vector.broadcast %15 : vector<1x256xf32> to vector<8x256xf32>
    %18 = arith.mulf %16, %17 : vector<8x256xf32>
    %19 = arith.addf %13, %18 : vector<8x256xf32>
    %cst = arith.constant 0.000000e+00 : f32
    %20 = vector.broadcast %cst : f32 to vector<8x256xf32>
    %21 = arith.maximumf %19, %20 : vector<8x256xf32>
    %22 = arith.truncf %21 : vector<8x256xf32> to vector<8x256xbf16>
    %c0_11 = arith.constant 0 : index
    %c0_12 = arith.constant 0 : index
    %23 = vector.load %arg4[%c0_11, %c0_12] : memref<256x256xbf16, #tpu.memory_space<vmem>>, vector<256x256xbf16>
    %cst_13 = arith.constant dense<0.000000e+00> : vector<8x256xf32>
    %24 = tpu.matmul %22, %23, %cst_13 {dimension_numbers = #tpu.dot_dimension_numbers<[1], [0], [0], [1], [0, 0, 1, 1], [], []>} : vector<8x256xbf16>, vector<256x256xbf16>, vector<8x256xf32> -> vector<8x256xf32>
    %c0_14 = arith.constant 0 : index
    %c0_15 = arith.constant 0 : index
    %25 = vector.load %arg5[%c0_14, %c0_15] : memref<1x256xf32, #tpu.memory_space<vmem>>, vector<1x256xf32>
    %26 = vector.broadcast %25 : vector<1x256xf32> to vector<8x256xf32>
    %27 = arith.addf %24, %26 : vector<8x256xf32>
    %cst_16 = arith.constant 0.000000e+00 : f32
    %28 = vector.broadcast %cst_16 : f32 to vector<8x256xf32>
    %29 = arith.maximumf %27, %28 : vector<8x256xf32>
    %c0_17 = arith.constant 0 : index
    %c0_18 = arith.constant 0 : index
    %30 = vector.load %arg6[%c0_17, %c0_18] : memref<1x256xf32, #tpu.memory_space<vmem>>, vector<1x256xf32>
    %cst_19 = arith.constant dense<0.000000e+00> : vector<1x8xf32>
    %31 = tpu.matmul %30, %29, %cst_19 {dimension_numbers = #tpu.dot_dimension_numbers<[1], [1], [0], [0], [0, 0, 1, 0], [], []>} : vector<1x256xf32>, vector<8x256xf32>, vector<1x8xf32> -> vector<1x8xf32>
    %c0_20 = arith.constant 0 : index
    %c0_21 = arith.constant 0 : index
    %32 = memref.load %arg7[%c0_20, %c0_21] : memref<1x1xf32, #tpu.memory_space<smem>>
    %33 = vector.broadcast %32 : f32 to vector<1x8xf32>
    %34 = arith.addf %31, %33 : vector<1x8xf32>
    %c0_22 = arith.constant 0 : index
    %c0_23 = arith.constant 0 : index
    %35 = vector.load %arg8[%c0_22, %c0_23] : memref<1x8xf32, #tpu.memory_space<vmem>>, vector<1x8xf32>
    tpu.vector_store %arg8[%c0_22, %c0_23], %34 {strides = array<i32>} : memref<1x8xf32, #tpu.memory_space<vmem>>, vector<1x8xf32>,
    return
  }
  func.func @transform_0(%arg0: i32) -> (i32, i32) {
    %c0_i32 = arith.constant 0 : i32
    %c0_i32_0 = arith.constant 0 : i32
    return %arg0, %c0_i32 : i32, i32
  }
  func.func @transform_1(%arg0: i32) -> (i32, i32) {
    %c0_i32 = arith.constant 0 : i32
    %c0_i32_0 = arith.constant 0 : i32
    %c0_i32_1 = arith.constant 0 : i32
    return %c0_i32, %c0_i32_0 : i32, i32
  }
  func.func @transform_2(%arg0: i32) -> (i32, i32) {
    %c0_i32 = arith.constant 0 : i32
    %c0_i32_0 = arith.constant 0 : i32
    %c0_i32_1 = arith.constant 0 : i32
    return %c0_i32, %c0_i32_0 : i32, i32
  }
  func.func @transform_3(%arg0: i32) -> (i32, i32) {
    %c0_i32 = arith.constant 0 : i32
    %c0_i32_0 = arith.constant 0 : i32
    %c0_i32_1 = arith.constant 0 : i32
    return %c0_i32, %c0_i32_0 : i32, i32
  }
  func.func @transform_4(%arg0: i32) -> (i32, i32) {
    %c0_i32 = arith.constant 0 : i32
    %c0_i32_0 = arith.constant 0 : i32
    %c0_i32_1 = arith.constant 0 : i32
    return %c0_i32, %c0_i32_0 : i32, i32
  }
  func.func @transform_5(%arg0: i32) -> (i32, i32) {
    %c0_i32 = arith.constant 0 : i32
    %c0_i32_0 = arith.constant 0 : i32
    %c0_i32_1 = arith.constant 0 : i32
    return %c0_i32, %c0_i32_0 : i32, i32
  }
  func.func @transform_6(%arg0: i32) -> (i32, i32) {
    %c0_i32 = arith.constant 0 : i32
    %c0_i32_0 = arith.constant 0 : i32
    %c0_i32_1 = arith.constant 0 : i32
    return %c0_i32, %c0_i32_0 : i32, i32
  }
  func.func @transform_7(%arg0: i32) -> (i32, i32) {
    %c0_i32 = arith.constant 0 : i32
    %c0_i32_0 = arith.constant 0 : i32
    return %c0_i32, %arg0 : i32, i32
  }
}

</mosaic_0001>

<llo_original>
// kernel: tpu_custom_call.1
$region0: #{tpu_custom_call.1}
  #allocation0 [shape = 'u32[]', space=smem, size = 0x4, offset = 0x4, fixed_abs, tag = 'smem constant byte address 0x4 - core index']
  #allocation1 [shape = 'u32[144,128]{1,0:T(1,128)}', space=vmem, size = 0x12000, scoped, tag = 'internal scratch']
  #allocation2 [shape = 'f32[1,1]{1,0:T(1,128)S(6)}', space=smem, size = 0x200, scoped, tag = 'scoped memory for tpu_custom_call.1']
  %s0 = inlined_call_operand.vmem [shape: f32[8,3], index: 0, kind: input, shape index: {}]
  %s1 = inlined_call_operand.vmem [shape: f32[3,256], index: 1, kind: input, shape index: {}]
  %s2 = inlined_call_operand.vmem [shape: f32[1,256], index: 2, kind: input, shape index: {}]
  %s3 = inlined_call_operand.hbm [shape: bf16[256,256], index: 3, kind: input, shape index: {}]
  %s4 = inlined_call_operand.vmem [shape: f32[1,256], index: 4, kind: input, shape index: {}]
  %s5 = inlined_call_operand.vmem [shape: f32[1,256], index: 5, kind: input, shape index: {}]
  %s6 = inlined_call_operand.<no memory space> [shape: f32[1,1], index: 6, kind: input, shape index: {}]
  %s7 = inlined_call_operand.hbm [shape: f32[1,8], index: 7, kind: output, shape index: {}]
  %s8 = sld [smem:[#allocation0]]
  $region42: #{tpu_custom_call.1} parent=0
    _
  %s10 = ssub.s32 1, %s8
  %s11 = scalar_select 0, %s10, %s8
  %12 = sst [smem:[#allocation2]] %s6
  $region1: #{tpu_custom_call.1} parent=0
    #allocation3 [shape = 'u8[131072]{0}', space=vmem, size = 0x20000, scoped, tag = 'input window, operand 3, single buffered']
    #allocation4 [shape = 's32[1]{0}', space=sflag, size = 0x4, scoped, tag = 'scoped memory for tpu_custom_call.1']
    #allocation5 [shape = 's32[1]{0}', space=sflag, size = 0x4, scoped, tag = 'scoped memory for tpu_custom_call.1']
    #allocation6 [shape = 'u8[512]{0}', space=vmem, size = 0x400, scoped, tag = 'output window, operand 0, single buffered']
    %13 = vsyncpa [#allocation4], 0
    %14 = vsyncpa [#allocation5], 0
    // Predicated region
    $region2: #{tpu_custom_call.1} parent=1 // pred_check
      _
    $region3: #{tpu_custom_call.1} parent=1 // pred_check_branch
      %16 = sbr.rel (0) target = $region5
    $region4: #{tpu_custom_call.1} parent=1 // pred_region
      _
    $region5: #{tpu_custom_call.1} parent=1 // pred_fallthru
      _
    // Predicated region
    $region6: #{tpu_custom_call.1} parent=1 // pred_check
      _
    $region7: #{tpu_custom_call.1} parent=1 // pred_check_branch
      %18 = sbr.rel (0) target = $region9
    $region8: #{tpu_custom_call.1} parent=1 // pred_region
      _
    $region9: #{tpu_custom_call.1} parent=1 // pred_fallthru
      _
    // Predicated region
    $region10: #{tpu_custom_call.1} parent=1 // pred_check
      _
    $region11: #{tpu_custom_call.1} parent=1 // pred_check_branch
      %20 = sbr.rel (0) target = $region13
    $region12: #{tpu_custom_call.1} parent=1 // pred_region
      _
    $region13: #{tpu_custom_call.1} parent=1 // pred_fallthru
      _
    // Predicated region
    $region14: #{tpu_custom_call.1} parent=1 // pred_check
      _
    $region15: #{tpu_custom_call.1} parent=1 // pred_check_branch
      %22 = sbr.rel (0) target = $region17
    $region16: #{tpu_custom_call.1} parent=1 // pred_region
      %s24 = ssub.s32 4096, 4096
      %25 = vsyncadd [#allocation4], %s24
      %s26 = sshll.u32 [#allocation3], 4
      %s27 = int_to_ptr.vmem [resolvable:$true] %s26
      %32 = dma.hbm_to_vmem [thread:$0]  %s3, 4096, %s27, [#allocation4], 128, 128, 8
    $region17: #{tpu_custom_call.1} parent=1 // pred_fallthru
      _
    // Predicated region
    $region18: #{tpu_custom_call.1} parent=1 // pred_check
      _
    $region19: #{tpu_custom_call.1} parent=1 // pred_check_branch
      %34 = sbr.rel (0) target = $region21
    $region20: #{tpu_custom_call.1} parent=1 // pred_region
      _
    $region21: #{tpu_custom_call.1} parent=1 // pred_fallthru
      _
    // Predicated region
    $region22: #{tpu_custom_call.1} parent=1 // pred_check
      _
    $region23: #{tpu_custom_call.1} parent=1 // pred_check_branch
      %36 = sbr.rel (0) target = $region25
    $region24: #{tpu_custom_call.1} parent=1 // pred_region
      _
    $region25: #{tpu_custom_call.1} parent=1 // pred_fallthru
      _
    // Predicated region
    $region26: #{tpu_custom_call.1} parent=1 // pred_check
      _
    $region27: #{tpu_custom_call.1} parent=1 // pred_check_branch
      %38 = sbr.rel (0) target = $region29
    $region28: #{tpu_custom_call.1} parent=1 // pred_region
      _
    $region29: #{tpu_custom_call.1} parent=1 // pred_fallthru
      _
    // Predicated region
    $region30: #{tpu_custom_call.1} parent=1 // pred_check
      _
    $region31: #{tpu_custom_call.1} parent=1 // pred_check_branch
      %40 = sbr.rel (0) target = $region33
    $region32: #{tpu_custom_call.1} parent=1 // pred_region
      %41 = dma.done [#allocation4], 4096
    $region33: #{tpu_custom_call.1} parent=1 // pred_fallthru
      _
    %v42 = vld [vmem:[%s2] sm:$0x3]
    %v43 = vld [vmem:[%s0] sm:$0xff]
    %v44 = vld [vmem:[%s1] ss:$4 sm:$0x3]
    %46 = vset.pattern.permute.xlu0 0
    %47 = vperm.xlu0 %46, %v43
    %v48 = vpop.permute.xlu0 %47
    %v51 = vlaneseq
    %v52 = vshrl.u32 %v51, 7
    %v53 = vsub.s32 0, %v52
    %v54 = vrot.slane %v44, %v53
    %v55 = vlaneseq
    %v56 = vshrl.u32 %v55, 7
    %v57 = vsub.s32 1, %v56
    %v58 = vrot.slane %v44, %v57
    %v61 = vmul.f32 %v48, %v54
    %v62 = vmul.f32 %v48, %v58
    %v64 = vlaneseq
    %v65 = vshrl.u32 %v64, 7
    %v66 = vsub.s32 0, %v65
    %v67 = vrot.slane %v42, %v66
    %v68 = vlaneseq
    %v69 = vshrl.u32 %v68, 7
    %v70 = vsub.s32 1, %v69
    %v71 = vrot.slane %v42, %v70
    %v74 = vadd.f32 %v67, %v61
    %v75 = vadd.f32 %v71, %v62
    %s76 = scalar_lea.vmem %s1, 1
    %v77 = vld [vmem:[%s76] ss:$4 sm:$0x3]
    %78 = vset.pattern.permute.xlu0 1
    %79 = vperm.xlu0 %78, %v43
    %v80 = vpop.permute.xlu0 %79
    %v83 = vlaneseq
    %v84 = vshrl.u32 %v83, 7
    %v85 = vsub.s32 0, %v84
    %v86 = vrot.slane %v77, %v85
    %v87 = vlaneseq
    %v88 = vshrl.u32 %v87, 7
    %v89 = vsub.s32 1, %v88
    %v90 = vrot.slane %v77, %v89
    %v93 = vmul.f32 %v80, %v86
    %v94 = vmul.f32 %v80, %v90
    %v95 = vadd.f32 %v74, %v93
    %v96 = vadd.f32 %v75, %v94
    %s97 = scalar_lea.vmem %s1, 2
    %v98 = vld [vmem:[%s97] ss:$4 sm:$0x3]
    %99 = vset.pattern.permute.xlu0 2
    %100 = vperm.xlu0 %99, %v43
    %v101 = vpop.permute.xlu0 %100
    %v104 = vlaneseq
    %v105 = vshrl.u32 %v104, 7
    %v106 = vsub.s32 0, %v105
    %v107 = vrot.slane %v98, %v106
    %v108 = vlaneseq
    %v109 = vshrl.u32 %v108, 7
    %v110 = vsub.s32 1, %v109
    %v111 = vrot.slane %v98, %v110
    %v114 = vmul.f32 %v101, %v107
    %v115 = vmul.f32 %v101, %v111
    %v116 = vadd.f32 %v95, %v114
    %v117 = vadd.f32 %v96, %v115
    %v118 = vmax.f32 %v116, 0.0
    %v119 = vmax.f32 %v117, 0.0
    %v120 = vpack.c.bf16 %v118, %v118
    %v121 = vpack.c.bf16 %v119, %v119
    %v122 = vld [vmem:[#allocation3] sm:$0xff]
    %v123 = vld [vmem:[#allocation3 + $0x8] sm:$0xff]
    %v124 = vld [vmem:[#allocation3 + $0x10] sm:$0xff]
    %v125 = vld [vmem:[#allocation3 + $0x18] sm:$0xff]
    %v126 = vld [vmem:[#allocation3 + $0x20] sm:$0xff]
    %v127 = vld [vmem:[#allocation3 + $0x28] sm:$0xff]
    %v128 = vld [vmem:[#allocation3 + $0x30] sm:$0xff]
    %v129 = vld [vmem:[#allocation3 + $0x38] sm:$0xff]
    %v130 = vld [vmem:[#allocation3 + $0x40] sm:$0xff]
    %v131 = vld [vmem:[#allocation3 + $0x48] sm:$0xff]
    %v132 = vld [vmem:[#allocation3 + $0x50] sm:$0xff]
    %v133 = vld [vmem:[#allocation3 + $0x58] sm:$0xff]
    %v134 = vld [vmem:[#allocation3 + $0x60] sm:$0xff]
    %v135 = vld [vmem:[#allocation3 + $0x68] sm:$0xff]
    %v136 = vld [vmem:[#allocation3 + $0x70] sm:$0xff]
    %v137 = vld [vmem:[#allocation3 + $0x78] sm:$0xff]
    %v138 = vld [vmem:[#allocation3 + $0x80] sm:$0xff]
    %v139 = vld [vmem:[#allocation3 + $0x88] sm:$0xff]
    %v140 = vld [vmem:[#allocation3 + $0x90] sm:$0xff]
    %v141 = vld [vmem:[#allocation3 + $0x98] sm:$0xff]
    %v142 = vld [vmem:[#allocation3 + $0xa0] sm:$0xff]
    %v143 = vld [vmem:[#allocation3 + $0xa8] sm:$0xff]
    %v144 = vld [vmem:[#allocation3 + $0xb0] sm:$0xff]
    %v145 = vld [vmem:[#allocation3 + $0xb8] sm:$0xff]
    %v146 = vld [vmem:[#allocation3 + $0xc0] sm:$0xff]
    %v147 = vld [vmem:[#allocation3 + $0xc8] sm:$0xff]
    %v148 = vld [vmem:[#allocation3 + $0xd0] sm:$0xff]
    %v149 = vld [vmem:[#allocation3 + $0xd8] sm:$0xff]
    %v150 = vld [vmem:[#allocation3 + $0xe0] sm:$0xff]
    %v151 = vld [vmem:[#allocation3 + $0xe8] sm:$0xff]
    %v152 = vld [vmem:[#allocation3 + $0xf0] sm:$0xff]
    %v153 = vld [vmem:[#allocation3 + $0xf8] sm:$0xff]
    %v154 = vld [vmem:[%s4] sm:$0x3]
    %v156 = vlaneseq
    %v157 = vshrl.u32 %v156, 7
    %v158 = vsub.s32 0, %v157
    %v159 = vrot.slane %v154, %v158
    %v160 = vlaneseq
    %v161 = vshrl.u32 %v160, 7
    %v162 = vsub.s32 1, %v161
    %v163 = vrot.slane %v154, %v162
    %v198 = vunpack.c.l.b16 %v122
    %v199 = vunpack.c.h.b16 %v122
    %v200 = vunpack.c.l.b16 %v123
    %v201 = vunpack.c.h.b16 %v123
    %v202 = vunpack.c.l.b16 %v124
    %v203 = vunpack.c.h.b16 %v124
    %v204 = vunpack.c.l.b16 %v125
    %v205 = vunpack.c.h.b16 %v125
    %v206 = vunpack.c.l.b16 %v126
    %v207 = vunpack.c.h.b16 %v126
    %v208 = vunpack.c.l.b16 %v127
    %v209 = vunpack.c.h.b16 %v127
    %v210 = vunpack.c.l.b16 %v128
    %v211 = vunpack.c.h.b16 %v128
    %v212 = vunpack.c.l.b16 %v129
    %v213 = vunpack.c.h.b16 %v129
    %v214 = vunpack.c.l.b16 %v130
    %v215 = vunpack.c.h.b16 %v130
    %v216 = vunpack.c.l.b16 %v131
    %v217 = vunpack.c.h.b16 %v131
    %v218 = vunpack.c.l.b16 %v132
    %v219 = vunpack.c.h.b16 %v132
    %v220 = vunpack.c.l.b16 %v133
    %v221 = vunpack.c.h.b16 %v133
    %v222 = vunpack.c.l.b16 %v134
    %v223 = vunpack.c.h.b16 %v134
    %v224 = vunpack.c.l.b16 %v135
    %v225 = vunpack.c.h.b16 %v135
    %v226 = vunpack.c.l.b16 %v136
    %v227 = vunpack.c.h.b16 %v136
    %v228 = vunpack.c.l.b16 %v137
    %v229 = vunpack.c.h.b16 %v137
    %v230 = vunpack.c.l.b16 %v138
    %v231 = vunpack.c.h.b16 %v138
    %v232 = vunpack.c.l.b16 %v139
    %v233 = vunpack.c.h.b16 %v139
    %v234 = vunpack.c.l.b16 %v140
    %v235 = vunpack.c.h.b16 %v140
    %v236 = vunpack.c.l.b16 %v141
    %v237 = vunpack.c.h.b16 %v141
    %v238 = vunpack.c.l.b16 %v142
    %v239 = vunpack.c.h.b16 %v142
    %v240 = vunpack.c.l.b16 %v143
    %v241 = vunpack.c.h.b16 %v143
    %v242 = vunpack.c.l.b16 %v144
    %v243 = vunpack.c.h.b16 %v144
    %v244 = vunpack.c.l.b16 %v145
    %v245 = vunpack.c.h.b16 %v145
    %v246 = vunpack.c.l.b16 %v146
    %v247 = vunpack.c.h.b16 %v146
    %v248 = vunpack.c.l.b16 %v147
    %v249 = vunpack.c.h.b16 %v147
    %v250 = vunpack.c.l.b16 %v148
    %v251 = vunpack.c.h.b16 %v148
    %v252 = vunpack.c.l.b16 %v149
    %v253 = vunpack.c.h.b16 %v149
    %v254 = vunpack.c.l.b16 %v150
    %v255 = vunpack.c.h.b16 %v150
    %v256 = vunpack.c.l.b16 %v151
    %v257 = vunpack.c.h.b16 %v151
    %v258 = vunpack.c.l.b16 %v152
    %v259 = vunpack.c.h.b16 %v152
    %v260 = vunpack.c.l.b16 %v153
    %v261 = vunpack.c.h.b16 %v153
    %v262 = vpack.c.b16 %v200, %v198
    %v263 = vpack.c.b16 %v201, %v199
    %v264 = vpack.c.b16 %v204, %v202
    %v265 = vpack.c.b16 %v205, %v203
    %v266 = vpack.c.b16 %v208, %v206
    %v267 = vpack.c.b16 %v209, %v207
    %v268 = vpack.c.b16 %v212, %v210
    %v269 = vpack.c.b16 %v213, %v211
    %v270 = vpack.c.b16 %v216, %v214
    %v271 = vpack.c.b16 %v217, %v215
    %v272 = vpack.c.b16 %v220, %v218
    %v273 = vpack.c.b16 %v221, %v219
    %v274 = vpack.c.b16 %v224, %v222
    %v275 = vpack.c.b16 %v225, %v223
    %v276 = vpack.c.b16 %v228, %v226
    %v277 = vpack.c.b16 %v229, %v227
    %v278 = vpack.c.b16 %v232, %v230
    %v279 = vpack.c.b16 %v233, %v231
    %v280 = vpack.c.b16 %v236, %v234
    %v281 = vpack.c.b16 %v237, %v235
    %v282 = vpack.c.b16 %v240, %v238
    %v283 = vpack.c.b16 %v241, %v239
    %v284 = vpack.c.b16 %v244, %v242
    %v285 = vpack.c.b16 %v245, %v243
    %v286 = vpack.c.b16 %v248, %v246
    %v287 = vpack.c.b16 %v249, %v247
    %v288 = vpack.c.b16 %v252, %v250
    %v289 = vpack.c.b16 %v253, %v251
    %v290 = vpack.c.b16 %v256, %v254
    %v291 = vpack.c.b16 %v257, %v255
    %v292 = vpack.c.b16 %v260, %v258
    %v293 = vpack.c.b16 %v261, %v259
    %326 = vmatprep.subr.bf16.mxu0 %v263
    %327 = vmatpush1.bf16.msra.mxu0 %v262
    %328 = vmatprep.subr.bf16.mxu0 %v265
    %329 = vmatpush1.bf16.msra.mxu0 %v264
    %330 = vmatprep.subr.bf16.mxu0 %v267
    %331 = vmatpush1.bf16.msra.mxu0 %v266
    %332 = vmatprep.subr.bf16.mxu0 %v269
    %333 = vmatpush1.bf16.msra.mxu0 %v268
    %334 = vmatprep.subr.bf16.mxu0 %v271
    %335 = vmatpush1.bf16.msra.mxu0 %v270
    %336 = vmatprep.subr.bf16.mxu0 %v273
    %337 = vmatpush1.bf16.msra.mxu0 %v272
    %338 = vmatprep.subr.bf16.mxu0 %v275
    %339 = vmatpush1.bf16.msra.mxu0 %v274
    %340 = vmatprep.subr.bf16.mxu0 %v277
    %341 = vmatpush1.bf16.msra.mxu0 %v276
    %342 = vmatprep.subr.bf16.mxu0 %v279
    %343 = vmatpush1.bf16.msra.mxu0 %v278
    %344 = vmatprep.subr.bf16.mxu0 %v281
    %345 = vmatpush1.bf16.msra.mxu0 %v280
    %346 = vmatprep.subr.bf16.mxu0 %v283
    %347 = vmatpush1.bf16.msra.mxu0 %v282
    %348 = vmatprep.subr.bf16.mxu0 %v285
    %349 = vmatpush1.bf16.msra.mxu0 %v284
    %350 = vmatprep.subr.bf16.mxu0 %v287
    %351 = vmatpush1.bf16.msra.mxu0 %v286
    %352 = vmatprep.subr.bf16.mxu0 %v289
    %353 = vmatpush1.bf16.msra.mxu0 %v288
    %354 = vmatprep.subr.bf16.mxu0 %v291
    %355 = vmatpush1.bf16.msra.mxu0 %v290
    %356 = vmatprep.subr.bf16.mxu0 %v293
    %357 = vmatpush1.bf16.msra.mxu0 %v292
    %358 = vmatprep.mubr.bf16.mxu0 %v121
    %359 = vmatmul.mubr.bf16.gmra.mrb[0].mxu0 %v120
    %v360 = vpop.f32.mrb[0].mxu0
    %v361 = vadd.f32 %v159, %v360
    %v362 = vpop.f32.mrb[0].mxu0
    %v363 = vadd.f32 %v163, %v362
    %v364 = vpop.f32.mrb[0].mxu0
    %v365 = vpop.f32.mrb[0].mxu0
    %366 = vdwg.mxu0
    %v367 = vmax.f32 %v361, 0.0
    %v368 = vmax.f32 %v363, 0.0
    %v369 = vld [vmem:[%s5] sm:$0x3]
    %s370 = sld [smem:[#allocation2]]
    %v371 = vstv %s370
    %v373 = vlaneseq
    %v374 = vshrl.u32 %v373, 7
    %v375 = vsub.s32 0, %v374
    %v376 = vrot.slane %v369, %v375
    %v377 = vlaneseq
    %v378 = vshrl.u32 %v377, 7
    %v379 = vsub.s32 1, %v378
    %v380 = vrot.slane %v369, %v379
    %383 = vmatprep.subr.mxu0 %v368
    %384 = vmatpush1.xpose.msra.mxu0 %v367
    %385 = vmatprep.subr.mxu0 0.0
    %386 = vmatpush1.xpose.msra.mxu0 0.0
    %387 = vmatprep.subr.mxu0 0.0
    %388 = vmatpush1.xpose.msra.mxu0 0.0
    %389 = vmatprep.subr.mxu0 0.0
    %390 = vmatpush1.xpose.msra.mxu0 0.0
    %391 = vmatprep.subr.mxu0 0.0
    %392 = vmatpush1.xpose.msra.mxu0 0.0
    %393 = vmatprep.subr.mxu0 0.0
    %394 = vmatpush1.xpose.msra.mxu0 0.0
    %395 = vmatprep.subr.mxu0 0.0
    %396 = vmatpush1.xpose.msra.mxu0 0.0
    %397 = vmatprep.subr.mxu0 0.0
    %398 = vmatpush1.xpose.msra.mxu0 0.0
    %399 = vmatprep.subr.mxu0 0.0
    %400 = vmatpush1.xpose.msra.mxu0 0.0
    %401 = vmatprep.subr.mxu0 0.0
    %402 = vmatpush1.xpose.msra.mxu0 0.0
    %403 = vmatprep.subr.mxu0 0.0
    %404 = vmatpush1.xpose.msra.mxu0 0.0
    %405 = vmatprep.subr.mxu0 0.0
    %406 = vmatpush1.xpose.msra.mxu0 0.0
    %407 = vmatprep.subr.mxu0 0.0
    %408 = vmatpush1.xpose.msra.mxu0 0.0
    %409 = vmatprep.subr.mxu0 0.0
    %410 = vmatpush1.xpose.msra.mxu0 0.0
    %411 = vmatprep.subr.mxu0 0.0
    %412 = vmatpush1.xpose.msra.mxu0 0.0
    %413 = vmatprep.subr.mxu0 0.0
    %414 = vmatpush1.xpose.msra.mxu0 0.0
    %415 = vmatprep.subr.mxu0 0.0
    %416 = vmatpush1.xpose.msra.mxu0 0.0
    %417 = vmatprep.subr.mxu0 0.0
    %418 = vmatpush1.xpose.msra.mxu0 0.0
    %419 = vmatprep.subr.mxu0 0.0
    %420 = vmatpush1.xpose.msra.mxu0 0.0
    %421 = vmatprep.subr.mxu0 0.0
    %422 = vmatpush1.xpose.msra.mxu0 0.0
    %423 = vmatprep.subr.mxu0 0.0
    %424 = vmatpush1.xpose.msra.mxu0 0.0
    %425 = vmatprep.subr.mxu0 0.0
    %426 = vmatpush1.xpose.msra.mxu0 0.0
    %427 = vmatprep.subr.mxu0 0.0
    %428 = vmatpush1.xpose.msra.mxu0 0.0
    %429 = vmatprep.subr.mxu0 0.0
    %430 = vmatpush1.xpose.msra.mxu0 0.0
    %431 = vmatprep.subr.mxu0 0.0
    %432 = vmatpush1.xpose.msra.mxu0 0.0
    %433 = vmatprep.subr.mxu0 0.0
    %434 = vmatpush1.xpose.msra.mxu0 0.0
    %435 = vmatprep.subr.mxu0 0.0
    %436 = vmatpush1.xpose.msra.mxu0 0.0
    %437 = vmatprep.subr.mxu0 0.0
    %438 = vmatpush1.xpose.msra.mxu0 0.0
    %439 = vmatprep.subr.mxu0 0.0
    %440 = vmatpush1.xpose.msra.mxu0 0.0
    %441 = vmatprep.subr.mxu0 0.0
    %442 = vmatpush1.xpose.msra.mxu0 0.0
    %443 = vmatprep.subr.mxu0 0.0
    %444 = vmatpush1.xpose.msra.mxu0 0.0
    %445 = vmatprep.subr.mxu0 0.0
    %446 = vmatpush1.xpose.msra.mxu0 0.0
    %447 = vmatprep.mubr.f32.mxu0 %v380
    %448 = vmatmul.mubr.f32.gmra.mrb[0].mxu0 %v376
    %v449 = vpop.f32.mrb[0].mxu0
    %v450 = vadd.f32 %v371, %v449
    %v451 = vpop.f32.mrb[0].mxu0
    %452 = vdwg.mxu0
    %vm453 = vcmask 57344
    %454 = vst.msk [vmem:[#allocation6] sm:$0x1] %vm453, %v450
    // Predicated region
    $region34: #{tpu_custom_call.1} parent=1 // pred_check
      _
    $region35: #{tpu_custom_call.1} parent=1 // pred_check_branch
      %456 = sbr.rel (0) target = $region37
    $region36: #{tpu_custom_call.1} parent=1 // pred_region
      %s458 = ssub.s32 16, 16
      %459 = vsyncadd [#allocation5], %s458
      %s461 = sshll.u32 [#allocation6], 4
      %s462 = int_to_ptr.vmem [resolvable:$true] %s461
      %464 = dma.vmem_to_hbm [thread:$0]  %s462, 16, %s7, [#allocation5]
    $region37: #{tpu_custom_call.1} parent=1 // pred_fallthru
      _
    // Predicated region
    $region38: #{tpu_custom_call.1} parent=1 // pred_check
      _
    $region39: #{tpu_custom_call.1} parent=1 // pred_check_branch
      %466 = sbr.rel (0) target = $region41
    $region40: #{tpu_custom_call.1} parent=1 // pred_region
      %467 = dma.done [#allocation5], 16
    $region41: #{tpu_custom_call.1} parent=1 // pred_fallthru
      _
    %468 = vsyncpa [#allocation4], 1
    %469 = vsyncpa [#allocation5], 1

</llo_original>
